<compile_context>
chip_gen: v7x
topology: tpu7x:2x2x1
jax: 0.10.0
libtpu: 0.0.40
codegen_flags: <defaults>
</compile_context>

<pallas_src>
import jax
import jax.numpy as jnp
from jax.experimental import pallas as pl
from jax.experimental.pallas import tpu as pltpu


def yield_head_kernel(dec_ref, enc_ref, u1_ref, u2_ref, c_ref, out_ref):
    # dec_ref: (TB, H)  decoder last_hidden_states.view(-1, H) batch tile
    # enc_ref: (TB, H)  encoder_hidden_states[:, 0, :] batch tile (pre-sliced)
    # u1/u2:   (1, H)   fully-folded head weights (f32, resident across tiles)
    # c:       (1, 1)   fully-folded bias
    x1 = dec_ref[...].astype(jnp.float32)
    x2 = enc_ref[...].astype(jnp.float32)
    acc = x1 * u1_ref[...] + x2 * u2_ref[...]                  # VPU
    out = jnp.sum(acc, axis=-1, keepdims=True) + c_ref[...]    # XLU lane reduce
    out_ref[...] = out.astype(out_ref.dtype)


def prepare_head_params(params):
    """One-time offline fold of fc1..fc5 into (u1, u2, c).

    Exact for the reference forward: the stack is affine (no activation
    between fc layers, dropout is identity in eval mode).  Call this ONCE
    (outside any per-step jit) and pass the result to reaction_t5_yield_head.
    """
    w1, b1, w2, b2, w3a, w3b, b3, w4, b4, w5, b5 = [
        jnp.asarray(p, jnp.float32) for p in params
    ]
    H = w1.shape[0]
    w45 = w4 @ w5                       # (H, 1)   fc4∘fc5 weight
    b45 = b4 @ w5 + b5                  # (1, 1)
    va = w3a @ w45                      # (Hh, 1)  fold fc3 (top half) into it
    vb = w3b @ w45                      # (Hh, 1)  fold fc3 (bottom half)
    c3 = b3 @ w45 + b45                 # (1, 1)
    u1 = (w1 @ va).reshape(1, H)        # (1, H)   fold fc1
    u2 = (w2 @ vb).reshape(1, H)        # (1, H)   fold fc2
    c = b1 @ va + b2 @ vb + c3          # (1, 1)
    return u1, u2, c


def _pick_batch_tile(B):
    if B <= 16:
        return B
    # >=2 tiles so ("parallel",) shards the batch over both v7x TensorCores;
    # cap at 256 so single-TC v5e/v6e keep few, large tiles.
    half = pl.cdiv(B, 2)
    return min(256, ((half + 15) // 16) * 16)


def reaction_t5_yield_head(last_hidden_states, encoder_hidden_states,
                           folded_params):
    """last_hidden_states: (B, 1, H); encoder_hidden_states: (B, S, H).

    folded_params: output of prepare_head_params (u1, u2, c), all f32.
    Activations may be f32 or bf16; output is f32 (B, 1).
    """
    B, _, H = last_hidden_states.shape
    u1, u2, c = folded_params

    # Glue reshape / slice done in XLA so the kernel never sees the full
    # (B, S, H) encoder tensor (only its CLS row is ever read).
    dec = last_hidden_states.reshape(B, H)
    enc_cls = encoder_hidden_states[:, 0, :]

    tb = _pick_batch_tile(B)
    grid = (pl.cdiv(B, tb),)

    batch_map = lambda i: (i, 0)     # tiles along batch
    const_map = lambda i: (0, 0)     # folded params resident across tiles

    batch_spec = pl.BlockSpec((tb, H), batch_map)
    in_specs = [
        batch_spec,                          # dec
        batch_spec,                          # enc_cls
        pl.BlockSpec((1, H), const_map),     # u1
        pl.BlockSpec((1, H), const_map),     # u2
        pl.BlockSpec((1, 1), const_map),     # c
    ]

    act_itemsize = jnp.dtype(dec.dtype).itemsize
    flops = 4 * B * H + 2 * B                       # two GEMVs + bias
    bytes_accessed = (2 * B * H * act_itemsize      # dec + enc_cls
                      + 2 * H * 4 + 4               # u1, u2, c
                      + B * 4)                      # output
    cost = pl.CostEstimate(flops=flops, transcendentals=0,
                           bytes_accessed=bytes_accessed)

    return pl.pallas_call(
        yield_head_kernel,
        out_shape=jax.ShapeDtypeStruct((B, 1), jnp.float32),
        grid=grid,
        in_specs=in_specs,
        out_specs=pl.BlockSpec((tb, 1), batch_map),
        compiler_params=pltpu.CompilerParams(
            dimension_semantics=("parallel",),
            # Comfortably within v7x's 64 MiB/TC; double-buffered (tb, H)
            # activation tiles are the only non-trivial VMEM users now.
            vmem_limit_bytes=32 * 1024 * 1024,
        ),
        cost_estimate=cost,
    )(dec, enc_cls, u1, u2, c)


def init_params(key, hidden_size):
    """Deterministic init matching _init_weights: N(0, 0.01) weights, zero bias."""
    H = hidden_size
    Hh = H // 2
    ks = jax.random.split(key, 5)
    std = 0.01
    w1 = std * jax.random.normal(ks[0], (H, Hh), jnp.float32)
    b1 = jnp.zeros((1, Hh), jnp.float32)
    w2 = std * jax.random.normal(ks[1], (H, Hh), jnp.float32)
    b2 = jnp.zeros((1, Hh), jnp.float32)
    w3 = std * jax.random.normal(ks[2], (2 * Hh, H), jnp.float32)
    w3a, w3b = w3[:Hh, :], w3[Hh:, :]     # split for the hstack contraction
    b3 = jnp.zeros((1, H), jnp.float32)
    w4 = std * jax.random.normal(ks[3], (H, H), jnp.float32)
    b4 = jnp.zeros((1, H), jnp.float32)
    w5 = std * jax.random.normal(ks[4], (H, 1), jnp.float32)
    b5 = jnp.zeros((1, 1), jnp.float32)
    return (w1, b1, w2, b2, w3a, w3b, b3, w4, b4, w5, b5)


def reference_head(last_hidden_states, encoder_hidden_states, params):
    """Pure-JAX reference matching the PyTorch forward (per-layer, unfolded)."""
    w1, b1, w2, b2, w3a, w3b, b3, w4, b4, w5, b5 = params
    B, _, H = last_hidden_states.shape
    x1 = last_hidden_states.reshape(B, H)            # fc1 input: decoder output
    x2 = encoder_hidden_states[:, 0, :]              # fc2 input: encoder CLS row
    h1 = x1 @ w1 + b1
    h2 = x2 @ w2 + b2
    h3 = (jnp.concatenate([h1, h2], axis=-1)
          @ jnp.concatenate([w3a, w3b], axis=0) + b3)
    h4 = h3 @ w4 + b4
    return h4 @ w5 + b5


if __name__ == "__main__":
    B, S, H = 2, 8, 32
    key = jax.random.PRNGKey(0)
    k_enc, k_dec, k_par = jax.random.split(key, 3)

    # Synthetic stand-ins for the T5 encoder / single-step decoder outputs.
    encoder_hidden_states = jax.random.normal(k_enc, (B, S, H), jnp.float32)
    last_hidden_states = jax.random.normal(k_dec, (B, 1, H), jnp.float32)

    params = init_params(k_par, H)
    ref = reference_head(last_hidden_states, encoder_hidden_states, params)

    # One-time offline fold (hoisted out of the per-call path).
    folded = jax.tree_util.tree_map(jax.block_until_ready,
                                    prepare_head_params(params))

    # f32 activation path: matches the per-layer reference (up to matmul
    # re-association in the fold).
    out_f32 = reaction_t5_yield_head(last_hidden_states, encoder_hidden_states,
                                     folded)
    out_f32 = jax.block_until_ready(out_f32)
    assert out_f32.shape == (B, 1)
    assert jnp.allclose(out_f32, ref, atol=1e-6, rtol=1e-4)

    # bf16 activation path (f32 accumulation in-kernel): looser tolerance.
    out_bf16 = reaction_t5_yield_head(last_hidden_states.astype(jnp.bfloat16),
                                      encoder_hidden_states.astype(jnp.bfloat16),
                                      folded)
    out_bf16 = jax.block_until_ready(out_bf16)
    assert out_bf16.shape == (B, 1)
    assert jnp.allclose(out_bf16, ref, atol=1e-6, rtol=5e-2)

    print("KERNEL_OK")
</pallas_src>

<mosaic_0001>
module attributes {stable_mosaic.version = 11 : i64} {
  func.func @yield_head_kernel(%arg0: i32, %arg1: memref<2x32xf32, #tpu.memory_space<vmem>>, %arg2: memref<2x32xf32, #tpu.memory_space<vmem>>, %arg3: memref<1x32xf32, #tpu.memory_space<vmem>>, %arg4: memref<1x32xf32, #tpu.memory_space<vmem>>, %arg5: memref<1x1xf32, #tpu.memory_space<vmem>>, %arg6: memref<2x1xf32, #tpu.memory_space<vmem>>) attributes {dimension_semantics = [#tpu.dimension_semantics<parallel>], iteration_bounds = array<i64: 1>, scalar_prefetch = 0 : i64, scratch_operands = 0 : i64, tpu.core_type = #tpu.core_type<tc>, window_params = [{transform_indices = @transform_0, window_bounds = array<i64: 2, 32>}, {transform_indices = @transform_1, window_bounds = array<i64: 2, 32>}, {pipeline_mode = #tpu.pipeline_mode<synchronous>, transform_indices = @transform_2, window_bounds = array<i64: 1, 32>}, {pipeline_mode = #tpu.pipeline_mode<synchronous>, transform_indices = @transform_3, window_bounds = array<i64: 1, 32>}, {pipeline_mode = #tpu.pipeline_mode<synchronous>, transform_indices = @transform_4, window_bounds = array<i64: 1, 1>}, {transform_indices = @transform_5, window_bounds = array<i64: 2, 1>}]} {
    %c0 = arith.constant 0 : index
    %c0_0 = arith.constant 0 : index
    %0 = vector.load %arg1[%c0, %c0_0] : memref<2x32xf32, #tpu.memory_space<vmem>>, vector<2x32xf32>
    %c0_1 = arith.constant 0 : index
    %c0_2 = arith.constant 0 : index
    %1 = vector.load %arg2[%c0_1, %c0_2] : memref<2x32xf32, #tpu.memory_space<vmem>>, vector<2x32xf32>
    %c0_3 = arith.constant 0 : index
    %c0_4 = arith.constant 0 : index
    %2 = vector.load %arg3[%c0_3, %c0_4] : memref<1x32xf32, #tpu.memory_space<vmem>>, vector<1x32xf32>
    %3 = vector.broadcast %2 : vector<1x32xf32> to vector<2x32xf32>
    %4 = arith.mulf %0, %3 : vector<2x32xf32>
    %c0_5 = arith.constant 0 : index
    %c0_6 = arith.constant 0 : index
    %5 = vector.load %arg4[%c0_5, %c0_6] : memref<1x32xf32, #tpu.memory_space<vmem>>, vector<1x32xf32>
    %6 = vector.broadcast %5 : vector<1x32xf32> to vector<2x32xf32>
    %7 = arith.mulf %1, %6 : vector<2x32xf32>
    %8 = arith.addf %4, %7 : vector<2x32xf32>
    %cst = arith.constant dense<0.000000e+00> : vector<2xf32>
    %9 = vector.multi_reduction <add>, %8, %cst [1] : vector<2x32xf32> to vector<2xf32>
    %10 = vector.shape_cast %9 : vector<2xf32> to vector<2x1xf32>
    %c0_7 = arith.constant 0 : index
    %c0_8 = arith.constant 0 : index
    %11 = vector.load %arg5[%c0_7, %c0_8] : memref<1x1xf32, #tpu.memory_space<vmem>>, vector<1x1xf32>
    %12 = vector.broadcast %11 : vector<1x1xf32> to vector<2x1xf32>
    %13 = arith.addf %10, %12 : vector<2x1xf32>
    %c0_9 = arith.constant 0 : index
    %c0_10 = arith.constant 0 : index
    %14 = vector.load %arg6[%c0_9, %c0_10] : memref<2x1xf32, #tpu.memory_space<vmem>>, vector<2x1xf32>
    tpu.vector_store %arg6[%c0_9, %c0_10], %13 {strides = array<i32>} : memref<2x1xf32, #tpu.memory_space<vmem>>, vector<2x1xf32>,
    return
  }
  func.func @transform_0(%arg0: i32) -> (i32, i32) {
    %c0_i32 = arith.constant 0 : i32
    %c0_i32_0 = arith.constant 0 : i32
    return %arg0, %c0_i32 : i32, i32
  }
  func.func @transform_1(%arg0: i32) -> (i32, i32) {
    %c0_i32 = arith.constant 0 : i32
    %c0_i32_0 = arith.constant 0 : i32
    return %arg0, %c0_i32 : i32, i32
  }
  func.func @transform_2(%arg0: i32) -> (i32, i32) {
    %c0_i32 = arith.constant 0 : i32
    %c0_i32_0 = arith.constant 0 : i32
    %c0_i32_1 = arith.constant 0 : i32
    return %c0_i32, %c0_i32_0 : i32, i32
  }
  func.func @transform_3(%arg0: i32) -> (i32, i32) {
    %c0_i32 = arith.constant 0 : i32
    %c0_i32_0 = arith.constant 0 : i32
    %c0_i32_1 = arith.constant 0 : i32
    return %c0_i32, %c0_i32_0 : i32, i32
  }
  func.func @transform_4(%arg0: i32) -> (i32, i32) {
    %c0_i32 = arith.constant 0 : i32
    %c0_i32_0 = arith.constant 0 : i32
    %c0_i32_1 = arith.constant 0 : i32
    return %c0_i32, %c0_i32_0 : i32, i32
  }
  func.func @transform_5(%arg0: i32) -> (i32, i32) {
    %c0_i32 = arith.constant 0 : i32
    %c0_i32_0 = arith.constant 0 : i32
    return %arg0, %c0_i32 : i32, i32
  }
}

</mosaic_0001>

<llo_original>
// kernel: tpu_custom_call.1
$region0: #{tpu_custom_call.1}
  #allocation0 [shape = 'u32[]', space=smem, size = 0x4, offset = 0x4, fixed_abs, tag = 'smem constant byte address 0x4 - core index']
  #allocation1 [shape = 'u32[144,128]{1,0:T(1,128)}', space=vmem, size = 0x12000, scoped, tag = 'internal scratch']
  #allocation2 [shape = 'f32[1,1]{1,0:T(1,128)S(1)}', space=vmem, size = 0x200, scoped, tag = 'scoped memory for tpu_custom_call.1']
  %s0 = inlined_call_operand.vmem [shape: f32[2,32], index: 0, kind: input, shape index: {}]
  %s1 = inlined_call_operand.vmem [shape: f32[2,32], index: 1, kind: input, shape index: {}]
  %s2 = inlined_call_operand.vmem [shape: f32[1,32], index: 2, kind: input, shape index: {}]
  %s3 = inlined_call_operand.vmem [shape: f32[1,32], index: 3, kind: input, shape index: {}]
  %s4 = inlined_call_operand.<no memory space> [shape: f32[1,1], index: 4, kind: input, shape index: {}]
  %s5 = inlined_call_operand.vmem [shape: f32[2,1], index: 5, kind: output, shape index: {}]
  %s6 = sld [smem:[#allocation0]]
  $region30: #{tpu_custom_call.1} parent=0
    _
  %s8 = ssub.s32 1, %s6
  %s9 = scalar_select 0, %s8, %s6
  %v10 = vstv %s4
  %11 = vst [vmem:[#allocation2] sm:$0x1] %v10
  // Predicated region
  $region2: #{tpu_custom_call.1} parent=0 // pred_check
    _
  $region3: #{tpu_custom_call.1} parent=0 // pred_check_branch
    %13 = sbr.rel (0) target = $region5
  $region4: #{tpu_custom_call.1} parent=0 // pred_region
    _
  $region5: #{tpu_custom_call.1} parent=0 // pred_fallthru
    _
  // Predicated region
  $region6: #{tpu_custom_call.1} parent=0 // pred_check
    _
  $region7: #{tpu_custom_call.1} parent=0 // pred_check_branch
    %15 = sbr.rel (0) target = $region9
  $region8: #{tpu_custom_call.1} parent=0 // pred_region
    _
  $region9: #{tpu_custom_call.1} parent=0 // pred_fallthru
    _
  // Predicated region
  $region10: #{tpu_custom_call.1} parent=0 // pred_check
    _
  $region11: #{tpu_custom_call.1} parent=0 // pred_check_branch
    %17 = sbr.rel (0) target = $region13
  $region12: #{tpu_custom_call.1} parent=0 // pred_region
    _
  $region13: #{tpu_custom_call.1} parent=0 // pred_fallthru
    _
  // Predicated region
  $region14: #{tpu_custom_call.1} parent=0 // pred_check
    _
  $region15: #{tpu_custom_call.1} parent=0 // pred_check_branch
    %19 = sbr.rel (0) target = $region17
  $region16: #{tpu_custom_call.1} parent=0 // pred_region
    _
  $region17: #{tpu_custom_call.1} parent=0 // pred_fallthru
    _
  // Predicated region
  $region18: #{tpu_custom_call.1} parent=0 // pred_check
    _
  $region19: #{tpu_custom_call.1} parent=0 // pred_check_branch
    %21 = sbr.rel (0) target = $region21
  $region20: #{tpu_custom_call.1} parent=0 // pred_region
    _
  $region21: #{tpu_custom_call.1} parent=0 // pred_fallthru
    _
  %v22 = vld [vmem:[%s0] sm:$0x3]
  %v23 = vld [vmem:[%s1] sm:$0x3]
  %v24 = vld [vmem:[%s2] sm:$0x1]
  %v26 = vlaneseq
  %v27 = vshrl.u32 %v26, 7
  %v28 = vsub.s32 0, %v27
  %v29 = vrot.slane %v24, %v28
  %v31 = vmul.f32 %v22, %v29
  %v32 = vld [vmem:[%s3] sm:$0x1]
  %v34 = vlaneseq
  %v35 = vshrl.u32 %v34, 7
  %v36 = vsub.s32 0, %v35
  %v37 = vrot.slane %v32, %v36
  %v39 = vmul.f32 %v23, %v37
  %v40 = vadd.f32 %v31, %v39
  %vm41 = vcmask 254976
  %v42 = vsel %vm41, %v40, 0.0
  %43 = vadd.xlane.f32.xlu0 %v42
  %v44 = vpop.xlane.xlu0 %43
  %v45 = vld [vmem:[#allocation2] sm:$0x1]
  %v47 = vlaneseq
  %v48 = vshrl.u32 %v47, 7
  %v49 = vsub.s32 0, %v48
  %v50 = vrot.slane %v45, %v49
  %v52 = vadd.f32 %v44, %v50
  %vm53 = vcmask 1024
  %54 = vst.msk [vmem:[%s5] sm:$0x3] %vm53, %v52
  // Predicated region
  $region22: #{tpu_custom_call.1} parent=0 // pred_check
    _
  $region23: #{tpu_custom_call.1} parent=0 // pred_check_branch
    %56 = sbr.rel (0) target = $region25
  $region24: #{tpu_custom_call.1} parent=0 // pred_region
    _
  $region25: #{tpu_custom_call.1} parent=0 // pred_fallthru
    _
  // Predicated region
  $region26: #{tpu_custom_call.1} parent=0 // pred_check
    _
  $region27: #{tpu_custom_call.1} parent=0 // pred_check_branch
    %58 = sbr.rel (0) target = $region29
  $region28: #{tpu_custom_call.1} parent=0 // pred_region
    _
  $region29: #{tpu_custom_call.1} parent=0 // pred_fallthru
    _

</llo_original>
